<compile_context>
chip_gen: v7x
topology: tpu7x:2x2x1
jax: 0.10.0
libtpu: 0.0.40
codegen_flags: <defaults>
</compile_context>

<pallas_src>
import functools

import jax
import jax.numpy as jnp
from jax.experimental import pallas as pl
from jax.experimental.pallas import tpu as pltpu


# ----------------------------- config ----------------------------------------
class Config:
    hidden_size = 32
    num_attention_heads = 8           # head_dim = 4
    epsilon = 1e-6
    scale_embeddings = 10.0
    gate_scale = 5.0
    seq_length = 8
    num_prefixes = 4
    position_dim = 12                 # seq_length + num_prefixes
    use_einsum = True


# ----------------------------- parameter setup (glue) ------------------------
def _dense_headmix(c_init):
    """Fold the per-head-dim mixing weight c_init[d, g, h] into a dense (H, H)
    matrix M such that  y = x @ M  reproduces
      out_chunk_g[d] = sum_h c_init[d, g, h] * in_chunk_h[d].
    """
    D, NH, _ = c_init.shape
    M = jnp.zeros((NH * D, NH * D), dtype=jnp.float32)
    d_idx = jnp.arange(D)
    for h in range(NH):
        for g in range(NH):
            M = M.at[h * D + d_idx, g * D + d_idx].set(c_init[:, g, h])
    return M


def build_params(cfg, din, memory_index, retain_nablay=False):
    H = cfg.hidden_size
    NH = cfg.num_attention_heads
    D = H // NH
    assert din % D == 0
    assert memory_index % D == 0 and memory_index >= din
    num_partitions = din // D
    mem_head_start = memory_index // D
    start_shift = num_partitions if retain_nablay else 0

    eye = jnp.eye(num_partitions, dtype=jnp.float32)

    c_fc_init = jnp.zeros((D, NH, NH), dtype=jnp.float32)
    c_fc_init = c_fc_init.at[:, start_shift:start_shift + num_partitions,
                             start_shift:start_shift + num_partitions].set(
                                 eye / cfg.scale_embeddings)
    c_fc_init = c_fc_init.at[:, start_shift:start_shift + num_partitions,
                             mem_head_start + num_partitions:
                             mem_head_start + 2 * num_partitions].set(eye)

    c_proj_init = jnp.zeros((D, NH, NH), dtype=jnp.float32)
    c_proj_init = c_proj_init.at[:, start_shift:start_shift + num_partitions,
                                 start_shift:start_shift + num_partitions].set(
                                     cfg.scale_embeddings * eye)
    c_proj_init = c_proj_init.at[:, start_shift:start_shift + num_partitions,
                                 mem_head_start:mem_head_start + num_partitions].set(
                                     -cfg.scale_embeddings * eye)

    w_fc = _dense_headmix(c_fc_init)          # (H, H)
    w_proj = _dense_headmix(c_proj_init)      # (H, H)

    # self.w : tanh-gate pre-activation (1, 1, H) -> (1, H)
    w_gate = jnp.zeros((1, H), dtype=jnp.float32)
    if retain_nablay:
        w_gate = w_gate.at[0, din:2 * din].add(cfg.gate_scale)
    else:
        w_gate = w_gate.at[0, :din].add(cfg.gate_scale)

    # Gates(config) parameters, initialized exactly as in __init__.
    P = cfg.position_dim
    w = jnp.zeros((1, 2 * H), dtype=jnp.float32)
    u = jnp.zeros((1, 2 * H), dtype=jnp.float32)
    v = jnp.zeros((1, 2 * P), dtype=jnp.float32)
    w_bias = jnp.zeros(2, dtype=jnp.float32)
    u_bias = jnp.zeros(2, dtype=jnp.float32)
    v_bias = jnp.zeros(2, dtype=jnp.float32)
    v = v.at[0, cfg.seq_length:P].set(cfg.gate_scale)
    v = v.at[0, P + cfg.seq_length:2 * P].set(-cfg.gate_scale)
    v_bias = v_bias.at[1].add(cfg.gate_scale)

    # TODO(synk): Gates module source is not provided; reconstructed as
    #   gate_i = sigmoid(h . w_i + new . u_i + pos . v_i + biases_i),
    #   output = gate_0 * hidden + gate_1 * new.
    g_h = w.reshape(2, H).T                      # (H, 2)
    g_u = u.reshape(2, H).T                      # (H, 2)
    g_v = v.reshape(2, P).T                      # (P, 2)
    g_b = (w_bias + u_bias + v_bias).reshape(1, 2)

    return dict(w_gate=w_gate, w_fc=w_fc, w_proj=w_proj,
                g_h=g_h, g_u=g_u, g_v=g_v, g_b=g_b)


# ----------------------------- Pallas kernel ----------------------------------
def _layernorm_backward_kernel(x_ref, p_ref, wfc_ref, wproj_ref, cvec_ref,
                               gvb_ref, o_ref, *, epsilon):
    """Natural (tokens, features) layout.

    x_ref    : (tile, H)        hidden_states tokens
    p_ref    : (tile, P)        position_states tokens
    wfc_ref  : (H, H+3)         [W_fc_mixed | mean column | g_h]
    wproj_ref: (H, H+2)         [W_proj_mixed | W_proj_mixed @ g_u]
    cvec_ref : (3, H)           rows = [tanh(w); 1-tanh(w); tanh(w)^2 / sum]
    gvb_ref  : (2, P+1)         rows = [g_v0 | bias0], [g_v1 | bias1]
    o_ref    : (tile, H)
    """
    H = x_ref.shape[-1]
    P = p_ref.shape[-1]

    x = x_ref[...].astype(jnp.float32)           # (tile, H)
    p = p_ref[...].astype(jnp.float32)           # (tile, P)

    w = cvec_ref[0:1, :]                          # tanh(w_gate)        (1, H)
    omw = cvec_ref[1:2, :]                        # 1 - tanh(w_gate)
    wv = cvec_ref[2:3, :]                         # tanh(w)^2 / sum(tanh(w))

    # TODO(synk): LinearBackward (linear-attention backward pass) source not
    # provided; used as an identity pass-through on hidden_states here.
    back_gradient = x

    # Fused first matmul on the MXU (M = tile): emits the already-gate-mixed
    # first_layer, its weighted mean, and the g_h gate logit contributions.
    f = jnp.dot(back_gradient, wfc_ref[...], preferred_element_type=jnp.float32)
    first_layer = f[:, :H]                        # (tile, H)
    mean = f[:, H:H + 1]                          # (tile, 1)
    gh0 = f[:, H + 1:H + 2]
    gh1 = f[:, H + 2:H + 3]

    # Weighted variance layer-norm; per-row rsqrt on the EUP.
    centered = first_layer - mean
    var_sum = jnp.sum(wv * centered * centered, axis=-1, keepdims=True)
    inv_std = jax.lax.rsqrt(epsilon + var_sum)
    normalized = w * (centered * inv_std) + omw * first_layer

    # Fused second matmul: gate-mixed second_layer + g_u gate logit contributions
    # (g_u folded through the *mixed* proj weight in the wrapper).
    s = jnp.dot(normalized, wproj_ref[...], preferred_element_type=jnp.float32)
    second_layer = s[:, :H]
    gu0 = s[:, H:H + 1]
    gu1 = s[:, H + 1:H + 2]

    # Small position-gate term stays on the VPU (P lanes) + bias.
    gv0 = jnp.sum(p * gvb_ref[0:1, 0:P], axis=-1, keepdims=True) + gvb_ref[0:1, P:P + 1]
    gv1 = jnp.sum(p * gvb_ref[1:2, 0:P], axis=-1, keepdims=True) + gvb_ref[1:2, P:P + 1]

    g0 = jax.nn.sigmoid(gh0 + gu0 + gv0)
    g1 = jax.nn.sigmoid(gh1 + gu1 + gv1)

    o_ref[...] = (g0 * x + g1 * second_layer).astype(o_ref.dtype)


def layernorm_backward(hidden, positions, params, *, epsilon,
                       token_tile=2048, min_grid_steps=2):
    """hidden: (BT, H), positions: (BT, P) in natural row-major layout.

    No wrapper-side transposes / pads — inputs and output stay (tokens, feat).
    Returns (BT, H) in hidden.dtype (kernel computes in f32).
    """
    BT, H = hidden.shape
    P = positions.shape[-1]

    # Tile: as large as token_tile (amortizes ~0.35us/step overhead, long DMAs),
    # but keep >= min_grid_steps grid steps so the "parallel" token axis can be
    # sharded across both TensorCores on v7x.  Multiple of 8 sublanes.
    tile = min(token_tile, pl.cdiv(BT, min_grid_steps))
    tile = max(8, pl.cdiv(tile, 8) * 8)
    grid = (pl.cdiv(BT, tile),)
    # NOTE: if tile does not divide BT, Pallas clips the last block (OOB rows
    # are garbage on read and dropped on write; no cross-token mixing occurs,
    # so valid rows are unaffected).

    # ---- hoisted constants (computed once per call, tiny) -------------------
    w = jnp.tanh(params["w_gate"].astype(jnp.float32).reshape(1, H))   # (1, H)
    omw = 1.0 - w
    sum_w = jnp.sum(w)   # matches module semantics: no guard against ~0 sums
    wm = (w / sum_w).reshape(H, 1)                                     # (H, 1)
    wv = (w * w) / sum_w                                               # (1, H)

    eyeH = jnp.eye(H, dtype=jnp.float32)
    # Fold the tanh-gate mixes into the weights:  x @ W_mixed == w*(x@W) + (1-w)*x
    wfc_mixed = params["w_fc"].astype(jnp.float32) * w + eyeH * omw
    wproj_mixed = params["w_proj"].astype(jnp.float32) * w + eyeH * omw

    g_h = params["g_h"].astype(jnp.float32)                            # (H, 2)
    g_u = params["g_u"].astype(jnp.float32)                            # (H, 2)
    # Augmented MXU weights: mean column and gate matvecs ride the big dots.
    wfc_aug = jnp.concatenate([wfc_mixed, wfc_mixed @ wm, g_h], axis=1)    # (H, H+3)
    wproj_aug = jnp.concatenate([wproj_mixed, wproj_mixed @ g_u], axis=1)  # (H, H+2)

    cvec = jnp.concatenate([w, omw, wv], axis=0)                        # (3, H)
    gvb = jnp.concatenate([params["g_v"].astype(jnp.float32).T,
                           params["g_b"].astype(jnp.float32).T], axis=1)  # (2, P+1)

    kernel = functools.partial(_layernorm_backward_kernel, epsilon=epsilon)

    out = pl.pallas_call(
        kernel,
        out_shape=jax.ShapeDtypeStruct((BT, H), hidden.dtype),
        grid_spec=pltpu.PrefetchScalarGridSpec(
            num_scalar_prefetch=0,
            grid=grid,
            in_specs=[
                pl.BlockSpec((tile, H), lambda i: (i, 0)),       # hidden tokens
                pl.BlockSpec((tile, P), lambda i: (i, 0)),       # position tokens
                pl.BlockSpec((H, H + 3), lambda i: (0, 0)),      # fused c_fc weight
                pl.BlockSpec((H, H + 2), lambda i: (0, 0)),      # fused proj weight
                pl.BlockSpec((3, H), lambda i: (0, 0)),          # per-channel consts
                pl.BlockSpec((2, P + 1), lambda i: (0, 0)),      # gate v weights + bias
            ],
            out_specs=pl.BlockSpec((tile, H), lambda i: (i, 0)),
        ),
        compiler_params=pltpu.CompilerParams(
            dimension_semantics=("parallel",),
            # Only needed when the tile is pushed very large (v5e's default
            # scoped VMEM is 16 MiB); None keeps the platform default otherwise.
            vmem_limit_bytes=(64 * 1024 * 1024 if tile > 4096 else None),
        ),
    )(hidden, positions, wfc_aug, wproj_aug, cvec, gvb)

    return out


# ----------------------------- pure-JAX reference -----------------------------
def reference(hidden, positions, params, epsilon):
    weights = jnp.tanh(params["w_gate"])
    bg = hidden
    fl = bg @ params["w_fc"]
    fl = weights * fl + (1.0 - weights) * bg
    sw = jnp.sum(weights)
    mean = jnp.sum(fl * weights, axis=-1, keepdims=True) / sw
    var = jnp.sqrt(epsilon + jnp.sum((weights * (fl - mean)) ** 2,
                                     axis=-1, keepdims=True) / sw)
    ns = (fl - mean) / var
    ns = weights * ns + (1.0 - weights) * fl
    sl = ns @ params["w_proj"]
    sl = weights * sl + (1.0 - weights) * ns
    logits = (hidden @ params["g_h"] + sl @ params["g_u"]
              + positions @ params["g_v"] + params["g_b"])
    g = jax.nn.sigmoid(logits)
    return g[:, 0:1] * hidden + g[:, 1:2] * sl


# ----------------------------- main -------------------------------------------
if __name__ == "__main__":
    cfg = Config()
    din = 8             # multiple of head_dim (=4)
    memory_index = 16   # >= din, multiple of head_dim

    params = build_params(cfg, din, memory_index, retain_nablay=False)

    B, T = 4, cfg.position_dim          # 48 tokens -> 2 grid steps of 24 rows
    H, P = cfg.hidden_size, cfg.position_dim

    key = jax.random.PRNGKey(0)
    hidden_states = jax.random.normal(key, (B, T, H), dtype=jnp.float32)
    position_states = jnp.tile(jnp.eye(P, dtype=jnp.float32)[None, :T, :], (B, 1, 1))

    hid_flat = hidden_states.reshape(B * T, H)
    pos_flat = position_states.reshape(B * T, P)

    out = layernorm_backward(hid_flat, pos_flat, params, epsilon=cfg.epsilon)
    out = jax.block_until_ready(out)

    ref = reference(hid_flat, pos_flat, params, cfg.epsilon)
    assert out.shape == (B * T, H)
    assert jnp.allclose(out, ref, atol=1e-4, rtol=1e-4), "mismatch vs JAX reference"

    _ = out.reshape(B, T, H)
    print("KERNEL_OK")
</pallas_src>

<mosaic_0001>
module attributes {stable_mosaic.version = 11 : i64} {
  func.func @_layernorm_backward_kernel(%arg0: i32, %arg1: memref<24x32xf32, #tpu.memory_space<vmem>>, %arg2: memref<24x12xf32, #tpu.memory_space<vmem>>, %arg3: memref<32x35xf32, #tpu.memory_space<vmem>>, %arg4: memref<32x34xf32, #tpu.memory_space<vmem>>, %arg5: memref<3x32xf32, #tpu.memory_space<vmem>>, %arg6: memref<2x13xf32, #tpu.memory_space<vmem>>, %arg7: memref<24x32xf32, #tpu.memory_space<vmem>>) attributes {dimension_semantics = [#tpu.dimension_semantics<parallel>], iteration_bounds = array<i64: 2>, scalar_prefetch = 0 : i64, scratch_operands = 0 : i64, tpu.core_type = #tpu.core_type<tc>, window_params = [{transform_indices = @transform_0, window_bounds = array<i64: 24, 32>}, {transform_indices = @transform_1, window_bounds = array<i64: 24, 12>}, {pipeline_mode = #tpu.pipeline_mode<synchronous>, transform_indices = @transform_2, window_bounds = array<i64: 32, 35>}, {pipeline_mode = #tpu.pipeline_mode<synchronous>, transform_indices = @transform_3, window_bounds = array<i64: 32, 34>}, {pipeline_mode = #tpu.pipeline_mode<synchronous>, transform_indices = @transform_4, window_bounds = array<i64: 3, 32>}, {pipeline_mode = #tpu.pipeline_mode<synchronous>, transform_indices = @transform_5, window_bounds = array<i64: 2, 13>}, {transform_indices = @transform_6, window_bounds = array<i64: 24, 32>}]} {
    %c0 = arith.constant 0 : index
    %c0_0 = arith.constant 0 : index
    %0 = vector.load %arg1[%c0, %c0_0] : memref<24x32xf32, #tpu.memory_space<vmem>>, vector<24x32xf32>
    %c0_1 = arith.constant 0 : index
    %c0_2 = arith.constant 0 : index
    %1 = vector.load %arg2[%c0_1, %c0_2] : memref<24x12xf32, #tpu.memory_space<vmem>>, vector<24x12xf32>
    %c0_3 = arith.constant 0 : index
    %c0_4 = arith.constant 0 : index
    %2 = vector.load %arg5[%c0_3, %c0_4] : memref<3x32xf32, #tpu.memory_space<vmem>>, vector<1x32xf32>
    %c1 = arith.constant 1 : index
    %c0_5 = arith.constant 0 : index
    %3 = vector.load %arg5[%c1, %c0_5] : memref<3x32xf32, #tpu.memory_space<vmem>>, vector<1x32xf32>
    %c2 = arith.constant 2 : index
    %c0_6 = arith.constant 0 : index
    %4 = vector.load %arg5[%c2, %c0_6] : memref<3x32xf32, #tpu.memory_space<vmem>>, vector<1x32xf32>
    %c0_7 = arith.constant 0 : index
    %c0_8 = arith.constant 0 : index
    %5 = vector.load %arg3[%c0_7, %c0_8] : memref<32x35xf32, #tpu.memory_space<vmem>>, vector<32x35xf32>
    %cst = arith.constant dense<0.000000e+00> : vector<24x35xf32>
    %6 = tpu.matmul %0, %5, %cst {dimension_numbers = #tpu.dot_dimension_numbers<[1], [0], [0], [1], [0, 0, 1, 1], [], []>} : vector<24x32xf32>, vector<32x35xf32>, vector<24x35xf32> -> vector<24x35xf32>
    %7 = vector.extract_strided_slice %6 {offsets = [0, 0], sizes = [24, 32], strides = [1, 1]} : vector<24x35xf32> to vector<24x32xf32>
    %8 = vector.extract_strided_slice %6 {offsets = [0, 32], sizes = [24, 1], strides = [1, 1]} : vector<24x35xf32> to vector<24x1xf32>
    %9 = vector.extract_strided_slice %6 {offsets = [0, 33], sizes = [24, 1], strides = [1, 1]} : vector<24x35xf32> to vector<24x1xf32>
    %10 = vector.extract_strided_slice %6 {offsets = [0, 34], sizes = [24, 1], strides = [1, 1]} : vector<24x35xf32> to vector<24x1xf32>
    %11 = vector.broadcast %8 : vector<24x1xf32> to vector<24x32xf32>
    %12 = arith.subf %7, %11 : vector<24x32xf32>
    %13 = vector.broadcast %4 : vector<1x32xf32> to vector<24x32xf32>
    %14 = arith.mulf %13, %12 : vector<24x32xf32>
    %15 = arith.mulf %14, %12 : vector<24x32xf32>
    %cst_9 = arith.constant dense<0.000000e+00> : vector<24xf32>
    %16 = vector.multi_reduction <add>, %15, %cst_9 [1] : vector<24x32xf32> to vector<24xf32>
    %17 = vector.shape_cast %16 : vector<24xf32> to vector<24x1xf32>
    %cst_10 = arith.constant 9.99999997E-7 : f32
    %18 = vector.broadcast %cst_10 : f32 to vector<24x1xf32>
    %19 = arith.addf %18, %17 : vector<24x1xf32>
    %20 = math.rsqrt %19 : vector<24x1xf32>
    %21 = vector.broadcast %20 : vector<24x1xf32> to vector<24x32xf32>
    %22 = arith.mulf %12, %21 : vector<24x32xf32>
    %23 = vector.broadcast %2 : vector<1x32xf32> to vector<24x32xf32>
    %24 = arith.mulf %23, %22 : vector<24x32xf32>
    %25 = vector.broadcast %3 : vector<1x32xf32> to vector<24x32xf32>
    %26 = arith.mulf %25, %7 : vector<24x32xf32>
    %27 = arith.addf %24, %26 : vector<24x32xf32>
    %c0_11 = arith.constant 0 : index
    %c0_12 = arith.constant 0 : index
    %28 = vector.load %arg4[%c0_11, %c0_12] : memref<32x34xf32, #tpu.memory_space<vmem>>, vector<32x34xf32>
    %cst_13 = arith.constant dense<0.000000e+00> : vector<24x34xf32>
    %29 = tpu.matmul %27, %28, %cst_13 {dimension_numbers = #tpu.dot_dimension_numbers<[1], [0], [0], [1], [0, 0, 1, 1], [], []>} : vector<24x32xf32>, vector<32x34xf32>, vector<24x34xf32> -> vector<24x34xf32>
    %30 = vector.extract_strided_slice %29 {offsets = [0, 0], sizes = [24, 32], strides = [1, 1]} : vector<24x34xf32> to vector<24x32xf32>
    %31 = vector.extract_strided_slice %29 {offsets = [0, 32], sizes = [24, 1], strides = [1, 1]} : vector<24x34xf32> to vector<24x1xf32>
    %32 = vector.extract_strided_slice %29 {offsets = [0, 33], sizes = [24, 1], strides = [1, 1]} : vector<24x34xf32> to vector<24x1xf32>
    %c0_14 = arith.constant 0 : index
    %c0_15 = arith.constant 0 : index
    %33 = vector.load %arg6[%c0_14, %c0_15] : memref<2x13xf32, #tpu.memory_space<vmem>>, vector<1x12xf32>
    %34 = vector.broadcast %33 : vector<1x12xf32> to vector<24x12xf32>
    %35 = arith.mulf %1, %34 : vector<24x12xf32>
    %cst_16 = arith.constant dense<0.000000e+00> : vector<24xf32>
    %36 = vector.multi_reduction <add>, %35, %cst_16 [1] : vector<24x12xf32> to vector<24xf32>
    %37 = vector.shape_cast %36 : vector<24xf32> to vector<24x1xf32>
    %c0_17 = arith.constant 0 : index
    %c12 = arith.constant 12 : index
    %38 = vector.load %arg6[%c0_17, %c12] : memref<2x13xf32, #tpu.memory_space<vmem>>, vector<1x1xf32>
    %39 = vector.broadcast %38 : vector<1x1xf32> to vector<24x1xf32>
    %40 = arith.addf %37, %39 : vector<24x1xf32>
    %c1_18 = arith.constant 1 : index
    %c0_19 = arith.constant 0 : index
    %41 = vector.load %arg6[%c1_18, %c0_19] : memref<2x13xf32, #tpu.memory_space<vmem>>, vector<1x12xf32>
    %42 = vector.broadcast %41 : vector<1x12xf32> to vector<24x12xf32>
    %43 = arith.mulf %1, %42 : vector<24x12xf32>
    %cst_20 = arith.constant dense<0.000000e+00> : vector<24xf32>
    %44 = vector.multi_reduction <add>, %43, %cst_20 [1] : vector<24x12xf32> to vector<24xf32>
    %45 = vector.shape_cast %44 : vector<24xf32> to vector<24x1xf32>
    %c1_21 = arith.constant 1 : index
    %c12_22 = arith.constant 12 : index
    %46 = vector.load %arg6[%c1_21, %c12_22] : memref<2x13xf32, #tpu.memory_space<vmem>>, vector<1x1xf32>
    %47 = vector.broadcast %46 : vector<1x1xf32> to vector<24x1xf32>
    %48 = arith.addf %45, %47 : vector<24x1xf32>
    %49 = arith.addf %9, %31 : vector<24x1xf32>
    %50 = arith.addf %49, %40 : vector<24x1xf32>
    %51 = arith.negf %50 : vector<24x1xf32>
    %52 = math.exp %51 : vector<24x1xf32>
    %cst_23 = arith.constant 1.000000e+00 : f32
    %53 = vector.broadcast %cst_23 : f32 to vector<24x1xf32>
    %54 = arith.addf %53, %52 : vector<24x1xf32>
    %55 = arith.divf %53, %54 : vector<24x1xf32>
    %56 = arith.addf %10, %32 : vector<24x1xf32>
    %57 = arith.addf %56, %48 : vector<24x1xf32>
    %58 = arith.negf %57 : vector<24x1xf32>
    %59 = math.exp %58 : vector<24x1xf32>
    %cst_24 = arith.constant 1.000000e+00 : f32
    %60 = vector.broadcast %cst_24 : f32 to vector<24x1xf32>
    %61 = arith.addf %60, %59 : vector<24x1xf32>
    %62 = arith.divf %60, %61 : vector<24x1xf32>
    %63 = vector.broadcast %55 : vector<24x1xf32> to vector<24x32xf32>
    %64 = arith.mulf %63, %0 : vector<24x32xf32>
    %65 = vector.broadcast %62 : vector<24x1xf32> to vector<24x32xf32>
    %66 = arith.mulf %65, %30 : vector<24x32xf32>
    %67 = arith.addf %64, %66 : vector<24x32xf32>
    %c0_25 = arith.constant 0 : index
    %c0_26 = arith.constant 0 : index
    %68 = vector.load %arg7[%c0_25, %c0_26] : memref<24x32xf32, #tpu.memory_space<vmem>>, vector<24x32xf32>
    tpu.vector_store %arg7[%c0_25, %c0_26], %67 {strides = array<i32>} : memref<24x32xf32, #tpu.memory_space<vmem>>, vector<24x32xf32>,
    return
  }
  func.func @transform_0(%arg0: i32) -> (i32, i32) {
    %c0_i32 = arith.constant 0 : i32
    %c0_i32_0 = arith.constant 0 : i32
    return %arg0, %c0_i32 : i32, i32
  }
  func.func @transform_1(%arg0: i32) -> (i32, i32) {
    %c0_i32 = arith.constant 0 : i32
    %c0_i32_0 = arith.constant 0 : i32
    return %arg0, %c0_i32 : i32, i32
  }
  func.func @transform_2(%arg0: i32) -> (i32, i32) {
    %c0_i32 = arith.constant 0 : i32
    %c0_i32_0 = arith.constant 0 : i32
    %c0_i32_1 = arith.constant 0 : i32
    return %c0_i32, %c0_i32_0 : i32, i32
  }
  func.func @transform_3(%arg0: i32) -> (i32, i32) {
    %c0_i32 = arith.constant 0 : i32
    %c0_i32_0 = arith.constant 0 : i32
    %c0_i32_1 = arith.constant 0 : i32
    return %c0_i32, %c0_i32_0 : i32, i32
  }
  func.func @transform_4(%arg0: i32) -> (i32, i32) {
    %c0_i32 = arith.constant 0 : i32
    %c0_i32_0 = arith.constant 0 : i32
    %c0_i32_1 = arith.constant 0 : i32
    return %c0_i32, %c0_i32_0 : i32, i32
  }
  func.func @transform_5(%arg0: i32) -> (i32, i32) {
    %c0_i32 = arith.constant 0 : i32
    %c0_i32_0 = arith.constant 0 : i32
    %c0_i32_1 = arith.constant 0 : i32
    return %c0_i32, %c0_i32_0 : i32, i32
  }
  func.func @transform_6(%arg0: i32) -> (i32, i32) {
    %c0_i32 = arith.constant 0 : i32
    %c0_i32_0 = arith.constant 0 : i32
    return %arg0, %c0_i32 : i32, i32
  }
}

</mosaic_0001>

<llo_original>
// kernel: tpu_custom_call.1
$region0: #{tpu_custom_call.1}
  #allocation0 [shape = 'u32[]', space=smem, size = 0x4, offset = 0x4, fixed_abs, tag = 'smem constant byte address 0x4 - core index']
  #allocation1 [shape = 'u32[144,128]{1,0:T(1,128)}', space=vmem, size = 0x12000, scoped, tag = 'internal scratch']
  %s0 = inlined_call_operand.vmem [shape: f32[48,32], index: 0, kind: input, shape index: {}]
  %s1 = inlined_call_operand.vmem [shape: f32[48,12], index: 1, kind: input, shape index: {}]
  %s2 = inlined_call_operand.vmem [shape: f32[32,35], index: 2, kind: input, shape index: {}]
  %s3 = inlined_call_operand.vmem [shape: f32[32,34], index: 3, kind: input, shape index: {}]
  %s4 = inlined_call_operand.vmem [shape: f32[3,32], index: 4, kind: input, shape index: {}]
  %s5 = inlined_call_operand.vmem [shape: f32[2,13], index: 5, kind: input, shape index: {}]
  %s6 = inlined_call_operand.vmem [shape: f32[48,32], index: 6, kind: output, shape index: {}]
  %s7 = sld [smem:[#allocation0]]
  $region57: #{tpu_custom_call.1} parent=0
    _
  %s9 = ssub.s32 1, %s7
  %s10 = scalar_select 0, %s9, %s7
  loop: start=0, step=1, limit=4
  $region2: #{tpu_custom_call.1} parent=0 // loop_pre_header
    _
  $region3: #{tpu_custom_call.1} parent=0 // loop_header
    %s12 = sphi 0, %s16
    %p13 = scmp.ge.s32.totalorder %s12, 4
    %s22 = sphi 0, %s24
    %s25 = sphi 0, %s22
    %s26 = sphi 0, %s25
    %s42 = sphi 0, %s26
    %s48 = sphi 0, %s50
    %s51 = sphi 0, %s48
    %s52 = sphi 0, %s51
    %s68 = sphi 0, %s52
    %s72 = sphi 0, %s72
    %s74 = sphi 0, %s72
    %s75 = sphi 0, %s74
    %s89 = sphi 0, %s75
    %s93 = sphi 0, %s93
    %s95 = sphi 0, %s93
    %s96 = sphi 0, %s95
    %s110 = sphi 0, %s96
    %s114 = sphi 0, %s114
    %s116 = sphi 0, %s114
    %s117 = sphi 0, %s116
    %s131 = sphi 0, %s117
    %s135 = sphi 0, %s135
    %s137 = sphi 0, %s135
    %s138 = sphi 0, %s137
    %s152 = sphi 0, %s138
    %s158 = sphi 0, %s160
    %s161 = sphi 0, %s158
    %s162 = sphi 0, %s161
    %s178 = sphi 0, %s162
  $region4: #{tpu_custom_call.1} parent=0 // loop_header_branch
    %15 = sbr.rel (%p13) target = $region8
  $region5: #{tpu_custom_call.1} parent=0 // loop_body
    %s17 = ssub.s32 %s12, 1
    %s18 = ssub.s32 %s12, 2
    %s19 = sadd.s32 %s12, 1
    %s20 = ssub.s32 %s12, %s19
    %p21 = scmp.eq.s32.totalorder %s20, 0
    %s23 = sadd.s32 %s22, 1
    %s24 = scalar_select %p21, %s22, %s23
    %p27 = pneg %p21
    %p28 = scmp.eq.s32.totalorder %s12, 1
    %p29 = por %p27, %p28
    %p30 = scmp.ne.s32.totalorder %s22, %s25
    %p31 = scmp.eq.s32.totalorder %s12, 0
    %p32 = por %p30, %p31
    %p33 = scmp.ne.s32.totalorder %s22, %s25
    %p34 = scmp.eq.s32.totalorder %s17, 1
    %p35 = por %p33, %p34
    %p36 = scmp.ne.s32.totalorder %s25, %s26
    %p37 = scmp.eq.s32.totalorder %s17, 0
    %p38 = por %p36, %p37
    %p39 = scmp.ne.s32.totalorder %s25, %s26
    %p40 = scmp.eq.s32.totalorder %s18, 1
    %p41 = por %p39, %p40
    %p43 = scmp.ne.s32.totalorder %s26, %s42
    %p44 = scmp.eq.s32.totalorder %s18, 0
    %p45 = por %p43, %p44
    %s46 = ssub.s32 %s12, %s19
    %p47 = scmp.eq.s32.totalorder %s46, 0
    %s49 = sadd.s32 %s48, 1
    %s50 = scalar_select %p47, %s48, %s49
    %p53 = pneg %p47
    %p54 = scmp.eq.s32.totalorder %s12, 1
    %p55 = por %p53, %p54
    %p56 = scmp.ne.s32.totalorder %s48, %s51
    %p57 = scmp.eq.s32.totalorder %s12, 0
    %p58 = por %p56, %p57
    %p59 = scmp.ne.s32.totalorder %s48, %s51
    %p60 = scmp.eq.s32.totalorder %s17, 1
    %p61 = por %p59, %p60
    %p62 = scmp.ne.s32.totalorder %s51, %s52
    %p63 = scmp.eq.s32.totalorder %s17, 0
    %p64 = por %p62, %p63
    %p65 = scmp.ne.s32.totalorder %s51, %s52
    %p66 = scmp.eq.s32.totalorder %s18, 1
    %p67 = por %p65, %p66
    %p69 = scmp.ne.s32.totalorder %s52, %s68
    %p70 = scmp.eq.s32.totalorder %s18, 0
    %p71 = por %p69, %p70
    %s73 = sadd.s32 %s72, 1
    %p76 = scmp.eq.s32.totalorder %s12, 1
    %p77 = scmp.ne.s32.totalorder %s72, %s74
    %p78 = scmp.eq.s32.totalorder %s12, 0
    %p79 = por %p77, %p78
    %p80 = scmp.ne.s32.totalorder %s72, %s74
    %p81 = scmp.eq.s32.totalorder %s17, 1
    %p82 = por %p80, %p81
    %p83 = scmp.ne.s32.totalorder %s74, %s75
    %p84 = scmp.eq.s32.totalorder %s17, 0
    %p85 = por %p83, %p84
    %p86 = scmp.ne.s32.totalorder %s74, %s75
    %p87 = scmp.eq.s32.totalorder %s18, 1
    %p88 = por %p86, %p87
    %p90 = scmp.ne.s32.totalorder %s75, %s89
    %p91 = scmp.eq.s32.totalorder %s18, 0
    %p92 = por %p90, %p91
    %s94 = sadd.s32 %s93, 1
    %p97 = scmp.eq.s32.totalorder %s12, 1
    %p98 = scmp.ne.s32.totalorder %s93, %s95
    %p99 = scmp.eq.s32.totalorder %s12, 0
    %p100 = por %p98, %p99
    %p101 = scmp.ne.s32.totalorder %s93, %s95
    %p102 = scmp.eq.s32.totalorder %s17, 1
    %p103 = por %p101, %p102
    %p104 = scmp.ne.s32.totalorder %s95, %s96
    %p105 = scmp.eq.s32.totalorder %s17, 0
    %p106 = por %p104, %p105
    %p107 = scmp.ne.s32.totalorder %s95, %s96
    %p108 = scmp.eq.s32.totalorder %s18, 1
    %p109 = por %p107, %p108
    %p111 = scmp.ne.s32.totalorder %s96, %s110
    %p112 = scmp.eq.s32.totalorder %s18, 0
    %p113 = por %p111, %p112
    %s115 = sadd.s32 %s114, 1
    %p118 = scmp.eq.s32.totalorder %s12, 1
    %p119 = scmp.ne.s32.totalorder %s114, %s116
    %p120 = scmp.eq.s32.totalorder %s12, 0
    %p121 = por %p119, %p120
    %p122 = scmp.ne.s32.totalorder %s114, %s116
    %p123 = scmp.eq.s32.totalorder %s17, 1
    %p124 = por %p122, %p123
    %p125 = scmp.ne.s32.totalorder %s116, %s117
    %p126 = scmp.eq.s32.totalorder %s17, 0
    %p127 = por %p125, %p126
    %p128 = scmp.ne.s32.totalorder %s116, %s117
    %p129 = scmp.eq.s32.totalorder %s18, 1
    %p130 = por %p128, %p129
    %p132 = scmp.ne.s32.totalorder %s117, %s131
    %p133 = scmp.eq.s32.totalorder %s18, 0
    %p134 = por %p132, %p133
    %s136 = sadd.s32 %s135, 1
    %p139 = scmp.eq.s32.totalorder %s12, 1
    %p140 = scmp.ne.s32.totalorder %s135, %s137
    %p141 = scmp.eq.s32.totalorder %s12, 0
    %p142 = por %p140, %p141
    %p143 = scmp.ne.s32.totalorder %s135, %s137
    %p144 = scmp.eq.s32.totalorder %s17, 1
    %p145 = por %p143, %p144
    %p146 = scmp.ne.s32.totalorder %s137, %s138
    %p147 = scmp.eq.s32.totalorder %s17, 0
    %p148 = por %p146, %p147
    %p149 = scmp.ne.s32.totalorder %s137, %s138
    %p150 = scmp.eq.s32.totalorder %s18, 1
    %p151 = por %p149, %p150
    %p153 = scmp.ne.s32.totalorder %s138, %s152
    %p154 = scmp.eq.s32.totalorder %s18, 0
    %p155 = por %p153, %p154
    %s156 = ssub.s32 %s12, %s19
    %p157 = scmp.eq.s32.totalorder %s156, 0
    %s159 = sadd.s32 %s158, 1
    %s160 = scalar_select %p157, %s158, %s159
    %p163 = pneg %p157
    %p164 = scmp.eq.s32.totalorder %s12, 1
    %p165 = por %p163, %p164
    %p166 = scmp.ne.s32.totalorder %s158, %s161
    %p167 = scmp.eq.s32.totalorder %s12, 0
    %p168 = por %p166, %p167
    %p169 = scmp.ne.s32.totalorder %s158, %s161
    %p170 = scmp.eq.s32.totalorder %s17, 1
    %p171 = por %p169, %p170
    %p172 = scmp.ne.s32.totalorder %s161, %s162
    %p173 = scmp.eq.s32.totalorder %s17, 0
    %p174 = por %p172, %p173
    %p175 = scmp.ne.s32.totalorder %s161, %s162
    %p176 = scmp.eq.s32.totalorder %s18, 1
    %p177 = por %p175, %p176
    %p179 = scmp.ne.s32.totalorder %s162, %s178
    %p180 = scmp.eq.s32.totalorder %s18, 0
    %p181 = por %p179, %p180
    %p182 = scmp.le.s32.totalorder 1, %s12
    %p183 = scmp.lt.s32.totalorder %s12, 3
    %p184 = pnand %p182, %p183
    %p185 = pneg %p184
    // Predicated region
    $region9: #{tpu_custom_call.1} parent=5 // pred_check
      _
    $region10: #{tpu_custom_call.1} parent=5 // pred_check_branch
      %187 = sbr.rel (%p184) target = $region12
    $region11: #{tpu_custom_call.1} parent=5 // pred_region
      %s188 = ssub.s32 %s12, 1
      // Predicated region
      $region13: #{tpu_custom_call.1} parent=11 // pred_check
        %p189 = pneg %p85
      $region14: #{tpu_custom_call.1} parent=11 // pred_check_branch
        %191 = sbr.rel (%p189) target = $region16
      $region15: #{tpu_custom_call.1} parent=11 // pred_region
        _
      $region16: #{tpu_custom_call.1} parent=11 // pred_fallthru
        _
      // Predicated region
      $region17: #{tpu_custom_call.1} parent=11 // pred_check
        %p192 = pneg %p106
      $region18: #{tpu_custom_call.1} parent=11 // pred_check_branch
        %194 = sbr.rel (%p192) target = $region20
      $region19: #{tpu_custom_call.1} parent=11 // pred_region
        _
      $region20: #{tpu_custom_call.1} parent=11 // pred_fallthru
        _
      // Predicated region
      $region21: #{tpu_custom_call.1} parent=11 // pred_check
        %p195 = pneg %p127
      $region22: #{tpu_custom_call.1} parent=11 // pred_check_branch
        %197 = sbr.rel (%p195) target = $region24
      $region23: #{tpu_custom_call.1} parent=11 // pred_region
        _
      $region24: #{tpu_custom_call.1} parent=11 // pred_fallthru
        _
      // Predicated region
      $region25: #{tpu_custom_call.1} parent=11 // pred_check
        %p198 = pneg %p148
      $region26: #{tpu_custom_call.1} parent=11 // pred_check_branch
        %200 = sbr.rel (%p198) target = $region28
      $region27: #{tpu_custom_call.1} parent=11 // pred_region
        _
      $region28: #{tpu_custom_call.1} parent=11 // pred_fallthru
        _
    $region12: #{tpu_custom_call.1} parent=5 // pred_fallthru
      _
    %p201 = scmp.lt.s32.totalorder %s12, 2
    // Predicated region
    $region29: #{tpu_custom_call.1} parent=5 // pred_check
      %p202 = pneg %p201
    $region30: #{tpu_custom_call.1} parent=5 // pred_check_branch
      %204 = sbr.rel (%p202) target = $region32
    $region31: #{tpu_custom_call.1} parent=5 // pred_region
      // Predicated region
      $region33: #{tpu_custom_call.1} parent=31 // pred_check
        %p205 = pneg %p32
      $region34: #{tpu_custom_call.1} parent=31 // pred_check_branch
        %207 = sbr.rel (%p205) target = $region36
      $region35: #{tpu_custom_call.1} parent=31 // pred_region
        %s208 = smul.u32 3, %s12
        %p209 = scmp.lt.s32.totalorder %s208, 5
        %s210 = scalar_select %p209, %s208, 5
        %s211 = smul.addr %s210, 8
        %s212 = scalar_lea.vmem %s0, %s211
        %s213 = smul.u32 3, %s12
      $region36: #{tpu_custom_call.1} parent=31 // pred_fallthru
        _
      // Predicated region
      $region37: #{tpu_custom_call.1} parent=31 // pred_check
        %p214 = pneg %p58
      $region38: #{tpu_custom_call.1} parent=31 // pred_check_branch
        %216 = sbr.rel (%p214) target = $region40
      $region39: #{tpu_custom_call.1} parent=31 // pred_region
        %s217 = smul.u32 3, %s12
        %p218 = scmp.lt.s32.totalorder %s217, 5
        %s219 = scalar_select %p218, %s217, 5
        %s220 = smul.addr %s219, 8
        %s221 = scalar_lea.vmem %s1, %s220
        %s222 = smul.u32 3, %s12
      $region40: #{tpu_custom_call.1} parent=31 // pred_fallthru
        _
    $region32: #{tpu_custom_call.1} parent=5 // pred_fallthru
      _
    %p223 = scmp.le.s32.totalorder 1, %s12
    %p224 = scmp.lt.s32.totalorder %s12, 3
    %p225 = pnand %p223, %p224
    %p226 = pneg %p225
    // Predicated region
    $region41: #{tpu_custom_call.1} parent=5 // pred_check
      _
    $region42: #{tpu_custom_call.1} parent=5 // pred_check_branch
      %228 = sbr.rel (%p225) target = $region44
    $region43: #{tpu_custom_call.1} parent=5 // pred_region
      %s229 = ssub.s32 %s12, 1
      %s230 = smul.u32 3, %s17
      %p231 = scmp.lt.s32.totalorder %s230, 5
      %s232 = scalar_select %p231, %s230, 5
      %s233 = smul.addr %s232, 8
      %s234 = scalar_lea.vmem %s0, %s233
      %p235 = pneg %p38
      %p236 = pneg %p35
      %s237 = smul.u32 3, %s17
      %p238 = scmp.lt.s32.totalorder %s237, 5
      %s239 = scalar_select %p238, %s237, 5
      %s240 = smul.addr %s239, 8
      %s241 = scalar_lea.vmem %s1, %s240
      %p242 = pneg %p64
      %p243 = pneg %p61
      %p244 = pneg %p85
      %p245 = pneg %p82
      %p246 = pneg %p106
      %p247 = pneg %p103
      %p248 = pneg %p127
      %p249 = pneg %p124
      %p250 = pneg %p148
      %p251 = pneg %p145
      %p252 = pneg %p174
      %p253 = pneg %p171
      %s254 = smul.u32 3, %s17
      %p255 = scmp.lt.s32.totalorder %s254, 5
      %s256 = scalar_select %p255, %s254, 5
      %s257 = smul.addr %s256, 8
      %s258 = scalar_lea.vmem %s6, %s257
      %s259 = smul.u32 3, %s17
      %p260 = scmp.lt.s32.totalorder %s259, 5
      %s261 = scalar_select %p260, %s259, 5
      %s262 = smul.addr %s261, 8
      %s263 = scalar_lea.vmem %s0, %s262
      %s264 = smul.u32 3, %s17
      %s265 = smul.u32 3, %s17
      %p266 = scmp.lt.s32.totalorder %s265, 5
      %s267 = scalar_select %p266, %s265, 5
      %s268 = smul.addr %s267, 8
      %s269 = scalar_lea.vmem %s1, %s268
      %s270 = smul.u32 3, %s17
      %s271 = smul.u32 3, %s17
      %p272 = scmp.lt.s32.totalorder %s271, 5
      %s273 = scalar_select %p272, %s271, 5
      %s274 = smul.addr %s273, 8
      %s275 = scalar_lea.vmem %s6, %s274
      %s276 = smul.u32 3, %s17
      %v277 = vld [vmem:[%s263] sm:$0xff]
      %v278 = vld [vmem:[%s263 + $0x8] sm:$0xff]
      %v279 = vld [vmem:[%s263 + $0x10] sm:$0xff]
      %v280 = vld [vmem:[%s269] sm:$0xff]
      %v281 = vld [vmem:[%s269 + $0x8] sm:$0xff]
      %v282 = vld [vmem:[%s269 + $0x10] sm:$0xff]
      %v283 = vld [vmem:[%s4] sm:$0x1]
      %v284 = vld [vmem:[%s4 + $0x1] sm:$0x1]
      %v285 = vld [vmem:[%s4 + $0x2] sm:$0x1]
      %v286 = vld [vmem:[%s2] sm:$0xff]
      %v287 = vld [vmem:[%s2 + $0x8] sm:$0xff]
      %v288 = vld [vmem:[%s2 + $0x10] sm:$0xff]
      %v289 = vld [vmem:[%s2 + $0x18] sm:$0xff]
      %vm290 = vcmask 261120
      %v292 = vsel %vm290, %v277, 0
      %v295 = vsel %vm290, %v278, 0
      %v298 = vsel %vm290, %v279, 0
      %300 = vmatprep.subr.mxu0 0.0
      %301 = vmatpush1.msra.mxu0 %v286
      %302 = vmatprep.subr.mxu0 0.0
      %303 = vmatpush1.msra.mxu0 %v287
      %304 = vmatprep.subr.mxu0 0.0
      %305 = vmatpush1.msra.mxu0 %v288
      %306 = vmatprep.subr.mxu0 0.0
      %307 = vmatpush1.msra.mxu0 %v289
      %308 = vmatprep.subr.mxu0 0.0
      %309 = vmatpush1.msra.mxu0 0.0
      %310 = vmatprep.subr.mxu0 0.0
      %311 = vmatpush1.msra.mxu0 0.0
      %312 = vmatprep.subr.mxu0 0.0
      %313 = vmatpush1.msra.mxu0 0.0
      %314 = vmatprep.subr.mxu0 0.0
      %315 = vmatpush1.msra.mxu0 0.0
      %316 = vmatprep.subr.mxu0 0.0
      %317 = vmatpush1.msra.mxu0 0.0
      %318 = vmatprep.subr.mxu0 0.0
      %319 = vmatpush1.msra.mxu0 0.0
      %320 = vmatprep.subr.mxu0 0.0
      %321 = vmatpush1.msra.mxu0 0.0
      %322 = vmatprep.subr.mxu0 0.0
      %323 = vmatpush1.msra.mxu0 0.0
      %324 = vmatprep.subr.mxu0 0.0
      %325 = vmatpush1.msra.mxu0 0.0
      %326 = vmatprep.subr.mxu0 0.0
      %327 = vmatpush1.msra.mxu0 0.0
      %328 = vmatprep.subr.mxu0 0.0
      %329 = vmatpush1.msra.mxu0 0.0
      %330 = vmatprep.subr.mxu0 0.0
      %331 = vmatpush1.msra.mxu0 0.0
      %332 = vmatprep.subr.mxu0 0.0
      %333 = vmatpush1.msra.mxu0 0.0
      %334 = vmatprep.subr.mxu0 0.0
      %335 = vmatpush1.msra.mxu0 0.0
      %336 = vmatprep.subr.mxu0 0.0
      %337 = vmatpush1.msra.mxu0 0.0
      %338 = vmatprep.subr.mxu0 0.0
      %339 = vmatpush1.msra.mxu0 0.0
      %340 = vmatprep.subr.mxu0 0.0
      %341 = vmatpush1.msra.mxu0 0.0
      %342 = vmatprep.subr.mxu0 0.0
      %343 = vmatpush1.msra.mxu0 0.0
      %344 = vmatprep.subr.mxu0 0.0
      %345 = vmatpush1.msra.mxu0 0.0
      %346 = vmatprep.subr.mxu0 0.0
      %347 = vmatpush1.msra.mxu0 0.0
      %348 = vmatprep.subr.mxu0 0.0
      %349 = vmatpush1.msra.mxu0 0.0
      %350 = vmatprep.subr.mxu0 0.0
      %351 = vmatpush1.msra.mxu0 0.0
      %352 = vmatprep.subr.mxu0 0.0
      %353 = vmatpush1.msra.mxu0 0.0
      %354 = vmatprep.subr.mxu0 0.0
      %355 = vmatpush1.msra.mxu0 0.0
      %356 = vmatprep.subr.mxu0 0.0
      %357 = vmatpush1.msra.mxu0 0.0
      %358 = vmatprep.subr.mxu0 0.0
      %359 = vmatpush1.msra.mxu0 0.0
      %360 = vmatprep.subr.mxu0 0.0
      %361 = vmatpush1.msra.mxu0 0.0
      %362 = vmatprep.subr.mxu0 0.0
      %363 = vmatpush1.msra.mxu0 0.0
      %364 = vmatprep.mubr.f32.mxu0 0.0
      %365 = vmatmul.mubr.f32.gmra.mrb[0].mxu0 %v292
      %v366 = vpop.f32.mrb[0].mxu0
      %v367 = vadd.f32 0.0, %v366
      %v368 = vpop.f32.mrb[0].mxu0
      %369 = vmatprep.mubr.f32.mxu0 0.0
      %370 = vmatmul.mubr.f32.gmra.mrb[0].mxu0 %v295
      %v371 = vpop.f32.mrb[0].mxu0
      %v372 = vadd.f32 0.0, %v371
      %v373 = vpop.f32.mrb[0].mxu0
      %374 = vmatprep.mubr.f32.mxu0 0.0
      %375 = vmatmul.mubr.f32.gmra.mrb[0].mxu0 %v298
      %v376 = vpop.f32.mrb[0].mxu0
      %v377 = vadd.f32 0.0, %v376
      %v378 = vpop.f32.mrb[0].mxu0
      %379 = vdwg.mxu0
      %381 = vset.pattern.permute.xlu0 32
      %382 = vperm.xlu0 %381, %v367
      %v383 = vpop.permute.xlu0 %382
      %386 = vset.pattern.permute.xlu0 32
      %387 = vperm.xlu0 %386, %v372
      %v388 = vpop.permute.xlu0 %387
      %391 = vset.pattern.permute.xlu0 32
      %392 = vperm.xlu0 %391, %v377
      %v393 = vpop.permute.xlu0 %392
      %v395 = vsub.f32 %v367, %v383
      %v396 = vsub.f32 %v372, %v388
      %v397 = vsub.f32 %v377, %v393
      %v398 = vlaneseq
      %v399 = vshrl.u32 %v398, 7
      %v400 = vsub.s32 0, %v399
      %v401 = vrot.slane %v285, %v400
      %v402 = vmul.f32 %v401, %v395
      %v403 = vmul.f32 %v401, %v396
      %v404 = vmul.f32 %v401, %v397
      %v405 = vmul.f32 %v402, %v395
      %v406 = vmul.f32 %v403, %v396
      %v407 = vmul.f32 %v404, %v397
      %v408 = vsel %vm290, %v405, 0.0
      %409 = vadd.xlane.f32.xlu0 %v408
      %v410 = vpop.xlane.xlu0 %409
      %v411 = vsel %vm290, %v406, 0.0
      %412 = vadd.xlane.f32.xlu0 %v411
      %v413 = vpop.xlane.xlu0 %412
      %v414 = vsel %vm290, %v407, 0.0
      %415 = vadd.xlane.f32.xlu0 %v414
      %v416 = vpop.xlane.xlu0 %415
      %v417 = vadd.f32 %v410, 1e-06
      %v418 = vadd.f32 %v413, 1e-06
      %v419 = vadd.f32 %v416, 1e-06
      %v420 = vrsqrt.pop %v417
      %v421 = vrsqrt.pop %v418
      %v422 = vrsqrt.pop %v419
      %v423 = vmul.f32 %v395, %v420
      %v424 = vmul.f32 %v396, %v421
      %v425 = vmul.f32 %v397, %v422
      %v426 = vlaneseq
      %v427 = vshrl.u32 %v426, 7
      %v428 = vsub.s32 0, %v427
      %v429 = vrot.slane %v283, %v428
      %v430 = vmul.f32 %v429, %v423
      %v431 = vmul.f32 %v429, %v424
      %v432 = vmul.f32 %v429, %v425
      %v433 = vlaneseq
      %v434 = vshrl.u32 %v433, 7
      %v435 = vsub.s32 0, %v434
      %v436 = vrot.slane %v284, %v435
      %v437 = vmul.f32 %v436, %v367
      %v438 = vmul.f32 %v436, %v372
      %v439 = vmul.f32 %v436, %v377
      %v440 = vadd.f32 %v430, %v437
      %v441 = vadd.f32 %v431, %v438
      %v442 = vadd.f32 %v432, %v439
      %v443 = vld [vmem:[%s3] sm:$0xff]
      %v444 = vld [vmem:[%s3 + $0x8] sm:$0xff]
      %v445 = vld [vmem:[%s3 + $0x10] sm:$0xff]
      %v446 = vld [vmem:[%s3 + $0x18] sm:$0xff]
      %v448 = vsel %vm290, %v440, 0
      %v451 = vsel %vm290, %v441, 0
      %v454 = vsel %vm290, %v442, 0
      %456 = vmatprep.subr.mxu0 0.0
      %457 = vmatpush1.msra.mxu0 %v443
      %458 = vmatprep.subr.mxu0 0.0
      %459 = vmatpush1.msra.mxu0 %v444
      %460 = vmatprep.subr.mxu0 0.0
      %461 = vmatpush1.msra.mxu0 %v445
      %462 = vmatprep.subr.mxu0 0.0
      %463 = vmatpush1.msra.mxu0 %v446
      %464 = vmatprep.subr.mxu0 0.0
      %465 = vmatpush1.msra.mxu0 0.0
      %466 = vmatprep.subr.mxu0 0.0
      %467 = vmatpush1.msra.mxu0 0.0
      %468 = vmatprep.subr.mxu0 0.0
      %469 = vmatpush1.msra.mxu0 0.0
      %470 = vmatprep.subr.mxu0 0.0
      %471 = vmatpush1.msra.mxu0 0.0
      %472 = vmatprep.subr.mxu0 0.0
      %473 = vmatpush1.msra.mxu0 0.0
      %474 = vmatprep.subr.mxu0 0.0
      %475 = vmatpush1.msra.mxu0 0.0
      %476 = vmatprep.subr.mxu0 0.0
      %477 = vmatpush1.msra.mxu0 0.0
      %478 = vmatprep.subr.mxu0 0.0
      %479 = vmatpush1.msra.mxu0 0.0
      %480 = vmatprep.subr.mxu0 0.0
      %481 = vmatpush1.msra.mxu0 0.0
      %482 = vmatprep.subr.mxu0 0.0
      %483 = vmatpush1.msra.mxu0 0.0
      %484 = vmatprep.subr.mxu0 0.0
      %485 = vmatpush1.msra.mxu0 0.0
      %486 = vmatprep.subr.mxu0 0.0
      %487 = vmatpush1.msra.mxu0 0.0
      %488 = vmatprep.subr.mxu0 0.0
      %489 = vmatpush1.msra.mxu0 0.0
      %490 = vmatprep.subr.mxu0 0.0
      %491 = vmatpush1.msra.mxu0 0.0
      %492 = vmatprep.subr.mxu0 0.0
      %493 = vmatpush1.msra.mxu0 0.0
      %494 = vmatprep.subr.mxu0 0.0
      %495 = vmatpush1.msra.mxu0 0.0
      %496 = vmatprep.subr.mxu0 0.0
      %497 = vmatpush1.msra.mxu0 0.0
      %498 = vmatprep.subr.mxu0 0.0
      %499 = vmatpush1.msra.mxu0 0.0
      %500 = vmatprep.subr.mxu0 0.0
      %501 = vmatpush1.msra.mxu0 0.0
      %502 = vmatprep.subr.mxu0 0.0
      %503 = vmatpush1.msra.mxu0 0.0
      %504 = vmatprep.subr.mxu0 0.0
      %505 = vmatpush1.msra.mxu0 0.0
      %506 = vmatprep.subr.mxu0 0.0
      %507 = vmatpush1.msra.mxu0 0.0
      %508 = vmatprep.subr.mxu0 0.0
      %509 = vmatpush1.msra.mxu0 0.0
      %510 = vmatprep.subr.mxu0 0.0
      %511 = vmatpush1.msra.mxu0 0.0
      %512 = vmatprep.subr.mxu0 0.0
      %513 = vmatpush1.msra.mxu0 0.0
      %514 = vmatprep.subr.mxu0 0.0
      %515 = vmatpush1.msra.mxu0 0.0
      %516 = vmatprep.subr.mxu0 0.0
      %517 = vmatpush1.msra.mxu0 0.0
      %518 = vmatprep.subr.mxu0 0.0
      %519 = vmatpush1.msra.mxu0 0.0
      %520 = vmatprep.mubr.f32.mxu0 0.0
      %521 = vmatmul.mubr.f32.gmra.mrb[0].mxu0 %v448
      %v522 = vpop.f32.mrb[0].mxu0
      %v523 = vadd.f32 0.0, %v522
      %v524 = vpop.f32.mrb[0].mxu0
      %525 = vmatprep.mubr.f32.mxu0 0.0
      %526 = vmatmul.mubr.f32.gmra.mrb[0].mxu0 %v451
      %v527 = vpop.f32.mrb[0].mxu0
      %v528 = vadd.f32 0.0, %v527
      %v529 = vpop.f32.mrb[0].mxu0
      %530 = vmatprep.mubr.f32.mxu0 0.0
      %531 = vmatmul.mubr.f32.gmra.mrb[0].mxu0 %v454
      %v532 = vpop.f32.mrb[0].mxu0
      %v533 = vadd.f32 0.0, %v532
      %v534 = vpop.f32.mrb[0].mxu0
      %535 = vdwg.mxu0
      %v536 = vld [vmem:[%s5] sm:$0x1]
      %v537 = vlaneseq
      %v538 = vshrl.u32 %v537, 7
      %v539 = vsub.s32 0, %v538
      %v540 = vrot.slane %v536, %v539
      %v541 = vmul.f32 %v280, %v540
      %v542 = vmul.f32 %v281, %v540
      %v543 = vmul.f32 %v282, %v540
      %vm544 = vcmask 97280
      %v545 = vsel %vm544, %v541, 0.0
      %546 = vadd.xlane.f32.xlu0 %v545
      %v547 = vpop.xlane.xlu0 %546
      %v548 = vsel %vm544, %v542, 0.0
      %549 = vadd.xlane.f32.xlu0 %v548
      %v550 = vpop.xlane.xlu0 %549
      %v551 = vsel %vm544, %v543, 0.0
      %552 = vadd.xlane.f32.xlu0 %v551
      %v553 = vpop.xlane.xlu0 %552
      %v554 = vadd.f32 %v547, %v540
      %v555 = vadd.f32 %v550, %v540
      %v556 = vadd.f32 %v553, %v540
      %v557 = vld [vmem:[%s5 + $0x1] sm:$0x1]
      %v558 = vlaneseq
      %v559 = vshrl.u32 %v558, 7
      %v560 = vsub.s32 0, %v559
      %v561 = vrot.slane %v557, %v560
      %v562 = vmul.f32 %v280, %v561
      %v563 = vmul.f32 %v281, %v561
      %v564 = vmul.f32 %v282, %v561
      %v565 = vsel %vm544, %v562, 0.0
      %566 = vadd.xlane.f32.xlu0 %v565
      %v567 = vpop.xlane.xlu0 %566
      %v568 = vsel %vm544, %v563, 0.0
      %569 = vadd.xlane.f32.xlu0 %v568
      %v570 = vpop.xlane.xlu0 %569
      %v571 = vsel %vm544, %v564, 0.0
      %572 = vadd.xlane.f32.xlu0 %v571
      %v573 = vpop.xlane.xlu0 %572
      %v574 = vadd.f32 %v567, %v561
      %v575 = vadd.f32 %v570, %v561
      %v576 = vadd.f32 %v573, %v561
      %580 = vrot.lane.b32.xlu0 %v523, 1
      %v581 = vpop.permute.xlu0 %580
      %582 = vrot.lane.b32.xlu0 %v528, 1
      %v583 = vpop.permute.xlu0 %582
      %584 = vrot.lane.b32.xlu0 %v533, 1
      %v585 = vpop.permute.xlu0 %584
      %v589 = vadd.f32 %v367, %v581
      %v590 = vadd.f32 %v372, %v583
      %v591 = vadd.f32 %v377, %v585
      %595 = vrot.lane.b32.xlu0 %v554, 21
      %v596 = vpop.permute.xlu0 %595
      %597 = vrot.lane.b32.xlu0 %v555, 21
      %v598 = vpop.permute.xlu0 %597
      %599 = vrot.lane.b32.xlu0 %v556, 21
      %v600 = vpop.permute.xlu0 %599
      %v604 = vadd.f32 %v589, %v596
      %v605 = vadd.f32 %v590, %v598
      %v606 = vadd.f32 %v591, %v600
      %v607 = vxor.u32 %v604, 2147483648
      %v608 = vxor.u32 %v605, 2147483648
      %v609 = vxor.u32 %v606, 2147483648
      %v610 = vmul.f32 %v607, 1.442695
      %v611 = vpow.pop %v610
      %v612 = vmul.f32 %v608, 1.442695
      %v613 = vpow.pop %v612
      %v614 = vmul.f32 %v609, 1.442695
      %v615 = vpow.pop %v614
      %v616 = vadd.f32 %v611, 1.0
      %v617 = vadd.f32 %v613, 1.0
      %v618 = vadd.f32 %v615, 1.0
      %v619 = vrcp.pop %v616
      %v620 = vmul.f32 1.0, %v619
      %v621 = vrcp.pop %v617
      %v622 = vmul.f32 1.0, %v621
      %v623 = vrcp.pop %v618
      %v624 = vmul.f32 1.0, %v623
      %628 = vrot.lane.b32.xlu0 %v574, 22
      %v629 = vpop.permute.xlu0 %628
      %630 = vrot.lane.b32.xlu0 %v575, 22
      %v631 = vpop.permute.xlu0 %630
      %632 = vrot.lane.b32.xlu0 %v576, 22
      %v633 = vpop.permute.xlu0 %632
      %v637 = vadd.f32 %v589, %v629
      %v638 = vadd.f32 %v590, %v631
      %v639 = vadd.f32 %v591, %v633
      %v640 = vxor.u32 %v637, 2147483648
      %v641 = vxor.u32 %v638, 2147483648
      %v642 = vxor.u32 %v639, 2147483648
      %v643 = vmul.f32 %v640, 1.442695
      %v644 = vpow.pop %v643
      %v645 = vmul.f32 %v641, 1.442695
      %v646 = vpow.pop %v645
      %v647 = vmul.f32 %v642, 1.442695
      %v648 = vpow.pop %v647
      %v649 = vadd.f32 %v644, 1.0
      %v650 = vadd.f32 %v646, 1.0
      %v651 = vadd.f32 %v648, 1.0
      %v652 = vrcp.pop %v649
      %v653 = vmul.f32 1.0, %v652
      %v654 = vrcp.pop %v650
      %v655 = vmul.f32 1.0, %v654
      %v656 = vrcp.pop %v651
      %v657 = vmul.f32 1.0, %v656
      %659 = vset.pattern.permute.xlu0 33
      %660 = vperm.xlu0 %659, %v620
      %v661 = vpop.permute.xlu0 %660
      %664 = vset.pattern.permute.xlu0 33
      %665 = vperm.xlu0 %664, %v622
      %v666 = vpop.permute.xlu0 %665
      %669 = vset.pattern.permute.xlu0 33
      %670 = vperm.xlu0 %669, %v624
      %v671 = vpop.permute.xlu0 %670
      %v673 = vmul.f32 %v661, %v277
      %v674 = vmul.f32 %v666, %v278
      %v675 = vmul.f32 %v671, %v279
      %677 = vset.pattern.permute.xlu0 34
      %678 = vperm.xlu0 %677, %v653
      %v679 = vpop.permute.xlu0 %678
      %682 = vset.pattern.permute.xlu0 34
      %683 = vperm.xlu0 %682, %v655
      %v684 = vpop.permute.xlu0 %683
      %687 = vset.pattern.permute.xlu0 34
      %688 = vperm.xlu0 %687, %v657
      %v689 = vpop.permute.xlu0 %688
      %v691 = vmul.f32 %v679, %v523
      %v692 = vmul.f32 %v684, %v528
      %v693 = vmul.f32 %v689, %v533
      %v694 = vadd.f32 %v673, %v691
      %v695 = vadd.f32 %v674, %v692
      %v696 = vadd.f32 %v675, %v693
      %697 = vst.msk [vmem:[%s275] sm:$0xff] %vm290, %v694
      %698 = vst.msk [vmem:[%s275 + $0x8] sm:$0xff] %vm290, %v695
      %699 = vst.msk [vmem:[%s275 + $0x10] sm:$0xff] %vm290, %v696
      %s700 = smul.u32 3, %s17
      %p701 = scmp.lt.s32.totalorder %s700, 5
      %s702 = scalar_select %p701, %s700, 5
      %s703 = smul.addr %s702, 8
      %s704 = scalar_lea.vmem %s6, %s703
      // Predicated region
      $region45: #{tpu_custom_call.1} parent=43 // pred_check
        %p705 = pneg %p171
      $region46: #{tpu_custom_call.1} parent=43 // pred_check_branch
        %707 = sbr.rel (%p705) target = $region48
      $region47: #{tpu_custom_call.1} parent=43 // pred_region
        %s708 = smul.u32 3, %s17
      $region48: #{tpu_custom_call.1} parent=43 // pred_fallthru
        _
    $region44: #{tpu_custom_call.1} parent=5 // pred_fallthru
      _
    %p709 = scmp.le.s32.totalorder 2, %s12
    // Predicated region
    $region49: #{tpu_custom_call.1} parent=5 // pred_check
      %p710 = pneg %p709
    $region50: #{tpu_custom_call.1} parent=5 // pred_check_branch
      %712 = sbr.rel (%p710) target = $region52
    $region51: #{tpu_custom_call.1} parent=5 // pred_region
      %s713 = ssub.s32 %s12, 2
      // Predicated region
      $region53: #{tpu_custom_call.1} parent=51 // pred_check
        %p714 = pneg %p177
      $region54: #{tpu_custom_call.1} parent=51 // pred_check_branch
        %716 = sbr.rel (%p714) target = $region56
      $region55: #{tpu_custom_call.1} parent=51 // pred_region
        %s717 = smul.u32 3, %s18
        %p718 = scmp.lt.s32.totalorder %s717, 5
        %s719 = scalar_select %p718, %s717, 5
        %s720 = smul.addr %s719, 8
        %s721 = scalar_lea.vmem %s6, %s720
      $region56: #{tpu_custom_call.1} parent=51 // pred_fallthru
        _
    $region52: #{tpu_custom_call.1} parent=5 // pred_fallthru
      _
  $region6: #{tpu_custom_call.1} parent=0 // loop_footer
    %s16 = sadd.s32 1, %s12
  $region7: #{tpu_custom_call.1} parent=0 // loop_footer_branch
    %11 = sbr.rel target = $region3
  $region8: #{tpu_custom_call.1} parent=0 // loop_exit
    _

</llo_original>
